<compile_context>
chip_gen: v6e
topology: v6e:2x2x1
jax: 0.10.0
libtpu: 0.0.40
codegen_flags: <defaults>
</compile_context>

<pallas_src>
import jax
import jax.numpy as jnp
from jax.experimental import pallas as pl
from jax.experimental.pallas import tpu as pltpu


def discriminator_kernel(
    x_ref,                       # [C,  M]  bf16,  M = N * R * R
    w1t_ref, b1_ref,             # [C1, C] bf16, [C1, 1] f32
    g1_ref, be1_ref,             # [C1, 1], [C1, 1] f32
    w2t_ref, b2_ref,             # [C2, C1] bf16, [C2, 1] f32
    g2_ref, be2_ref,             # [C2, 1], [C2, 1] f32
    pool_ref,                    # [M,  N] f32   (per-sample averaging matrix)
    w3t_ref, b3_ref,             # [C3, C2], [C3, 1] f32
    w4c_ref, b4_ref,             # [C3, 1], [1, 1] f32
    o_ref,                       # [1, N] f32
):
    eps = 1e-5
    m = x_ref.shape[1]                         # BN population per channel = N*R*R
    inv_m = 1.0 / float(m)

    # ---- conv1 (1x1) as one lane-dense MXU matmul -------------------------
    h1 = jnp.dot(w1t_ref[...], x_ref[...],
                 preferred_element_type=jnp.float32) + b1_ref[...]     # [C1, M]

    # ---- BN1 (training-mode batch stats, two-pass variance) + LeakyReLU ---
    mu1 = jnp.sum(h1, axis=1, keepdims=True) * inv_m
    d1 = h1 - mu1
    var1 = jnp.sum(d1 * d1, axis=1, keepdims=True) * inv_m
    a1 = d1 * (g1_ref[...] * jax.lax.rsqrt(var1 + eps)) + be1_ref[...]
    a1 = jnp.where(a1 > 0, a1, 0.2 * a1)                               # LeakyReLU(0.2)

    # ---- conv2 (1x1) -------------------------------------------------------
    h2 = jnp.dot(w2t_ref[...], a1.astype(w2t_ref.dtype),
                 preferred_element_type=jnp.float32) + b2_ref[...]     # [C2, M]

    # ---- BN2 + LeakyReLU ---------------------------------------------------
    mu2 = jnp.sum(h2, axis=1, keepdims=True) * inv_m
    d2 = h2 - mu2
    var2 = jnp.sum(d2 * d2, axis=1, keepdims=True) * inv_m
    a2 = d2 * (g2_ref[...] * jax.lax.rsqrt(var2 + eps)) + be2_ref[...]
    a2 = jnp.where(a2 > 0, a2, 0.2 * a2)

    # ---- AvgPool2d(kernel=R): per-sample mean over the RR pixels ----------
    # pool_ref[j*RR + p, j] = 1/RR  ->  pooled[:, j] = mean over sample j's pixels.
    pooled = jnp.dot(a2, pool_ref[...],
                     preferred_element_type=jnp.float32)               # [C2, N]

    # ---- FC head: Linear(C2->C3) + LeakyReLU + Linear(C3->1) + Sigmoid ----
    t = jnp.dot(w3t_ref[...], pooled,
                preferred_element_type=jnp.float32) + b3_ref[...]      # [C3, N]
    t = jnp.where(t > 0, t, 0.2 * t)
    # Linear(C3 -> 1) as a VPU multiply + sublane reduce (avoid 1-lane matmul).
    z = jnp.sum(t * w4c_ref[...], axis=0, keepdims=True) + b4_ref[...] # [1, N]
    o_ref[...] = 1.0 / (1.0 + jnp.exp(-z))


def discriminator_forward(x_nchw, params):
    """x_nchw: [N, C, R, R] f32 -> [N, 1] f32. GRL forward is identity."""
    n, c, r, _ = x_nchw.shape
    rr = r * r
    m = n * rr
    c1, c2, c3 = c // 2, c // 4, c // 8

    # One cheap host-side relayout to the channels-major, lane-dense layout
    # [C, N*RR] (lane index = sample*RR + pixel). bf16 inputs for the MXU.
    x2 = jnp.transpose(x_nchw.reshape(n, c, rr), (1, 0, 2)).reshape(c, m)
    x2 = x2.astype(jnp.bfloat16)

    # Tiny one-time weight re-layouts (channels-major kernel layout).
    w1t = params["w1"].T.astype(jnp.bfloat16)                    # [C1, C]
    b1 = params["b1"].reshape(c1, 1)
    g1 = params["g1"].reshape(c1, 1)
    be1 = params["be1"].reshape(c1, 1)
    w2t = params["w2"].T.astype(jnp.bfloat16)                    # [C2, C1]
    b2 = params["b2"].reshape(c2, 1)
    g2 = params["g2"].reshape(c2, 1)
    be2 = params["be2"].reshape(c2, 1)
    w3t = params["w3"].T                                         # [C3, C2]
    b3 = params["b3"].reshape(c3, 1)
    w4c = params["w4"].reshape(c3, 1)
    b4 = params["b4"].reshape(1, 1)
    # Per-sample averaging matrix for AvgPool2d(kernel=R): [M, N].
    pool_mat = jnp.repeat(jnp.eye(n, dtype=jnp.float32), rr, axis=0) / float(rr)

    # Raise the scoped-VMEM limit only if the resident batch actually needs it
    # (x bf16 + f32 h/a tiles + pooling matrix); stays None for small shapes.
    est_bytes = x2.size * 2 + pool_mat.size * 4 + 4 * m * (c1 + c2) * 3
    compiler_params = None
    if est_bytes > 12 * 1024 * 1024:
        compiler_params = pltpu.CompilerParams(
            vmem_limit_bytes=int(min(2 * est_bytes, 100 << 20)))

    # No grid: the whole (small) problem is one kernel invocation with all
    # operands resident in VMEM.
    out = pl.pallas_call(
        discriminator_kernel,
        out_shape=jax.ShapeDtypeStruct((1, n), jnp.float32),
        compiler_params=compiler_params,
    )(x2, w1t, b1, g1, be1, w2t, b2, g2, be2, pool_mat, w3t, b3, w4c, b4)

    return out.reshape(n, 1)


def make_params(key, indim):
    c1, c2, c3 = indim // 2, indim // 4, indim // 8
    ks = jax.random.split(key, 10)
    # Conv weights ~ N(0, 0.02) (weights_init); BN gamma ~ N(1, 0.02), beta = 0.
    return {
        "w1": 0.02 * jax.random.normal(ks[0], (indim, c1), jnp.float32),
        "b1": 0.01 * jax.random.normal(ks[1], (c1,), jnp.float32),
        "g1": 1.0 + 0.02 * jax.random.normal(ks[2], (c1,), jnp.float32),
        "be1": jnp.zeros((c1,), jnp.float32),
        "w2": 0.02 * jax.random.normal(ks[3], (c1, c2), jnp.float32),
        "b2": 0.01 * jax.random.normal(ks[4], (c2,), jnp.float32),
        "g2": 1.0 + 0.02 * jax.random.normal(ks[5], (c2,), jnp.float32),
        "be2": jnp.zeros((c2,), jnp.float32),
        "w3": 0.1 * jax.random.normal(ks[6], (c2, c3), jnp.float32),
        "b3": 0.01 * jax.random.normal(ks[7], (c3,), jnp.float32),
        "w4": 0.1 * jax.random.normal(ks[8], (c3, 1), jnp.float32),
        "b4": 0.01 * jax.random.normal(ks[9], (1,), jnp.float32),
    }


def reference_forward(x_nchw, params):
    """Pure-JAX reference of the PyTorch forward (training-mode BN, conv biases
    included; convs use the same bf16-input / f32-accumulate precision)."""
    n, c, r, _ = x_nchw.shape
    h = jnp.transpose(x_nchw, (0, 2, 3, 1)).reshape(n * r * r, c)
    eps = 1e-5

    def conv_bn_lrelu(h, w, b, g, be):
        h = jnp.dot(h.astype(jnp.bfloat16), w.astype(jnp.bfloat16),
                    preferred_element_type=jnp.float32) + b
        mu = jnp.mean(h, axis=0, keepdims=True)
        var = jnp.mean((h - mu) ** 2, axis=0, keepdims=True)   # biased, as PyTorch BN
        h = (h - mu) / jnp.sqrt(var + eps) * g + be
        return jnp.where(h > 0, h, 0.2 * h)

    h = conv_bn_lrelu(h, params["w1"], params["b1"], params["g1"], params["be1"])
    h = conv_bn_lrelu(h, params["w2"], params["b2"], params["g2"], params["be2"])
    h = jnp.mean(h.reshape(n, r * r, -1), axis=1)
    h = h @ params["w3"] + params["b3"]
    h = jnp.where(h > 0, h, 0.2 * h)
    z = h @ params["w4"] + params["b4"]
    return jax.nn.sigmoid(z)


if __name__ == "__main__":
    N, INDIM, ROI = 2, 32, 8              # x: [N, indim, roi_size, roi_size]
    key = jax.random.PRNGKey(0)
    kx, kp = jax.random.split(key)
    x = jax.random.normal(kx, (N, INDIM, ROI, ROI), jnp.float32)
    params = make_params(kp, INDIM)

    out = jax.block_until_ready(discriminator_forward(x, params))
    ref = reference_forward(x, params)

    assert out.shape == (N, 1)
    assert jnp.allclose(out, ref, rtol=2e-3, atol=2e-3), (out, ref)
    print("KERNEL_OK")
</pallas_src>

<mosaic_0001>
module attributes {stable_mosaic.version = 11 : i64} {
  func.func @discriminator_kernel(%arg0: memref<32x128xbf16, #tpu.memory_space<vmem>>, %arg1: memref<16x32xbf16, #tpu.memory_space<vmem>>, %arg2: memref<16x1xf32, #tpu.memory_space<vmem>>, %arg3: memref<16x1xf32, #tpu.memory_space<vmem>>, %arg4: memref<16x1xf32, #tpu.memory_space<vmem>>, %arg5: memref<8x16xbf16, #tpu.memory_space<vmem>>, %arg6: memref<8x1xf32, #tpu.memory_space<vmem>>, %arg7: memref<8x1xf32, #tpu.memory_space<vmem>>, %arg8: memref<8x1xf32, #tpu.memory_space<vmem>>, %arg9: memref<128x2xf32, #tpu.memory_space<vmem>>, %arg10: memref<4x8xf32, #tpu.memory_space<vmem>>, %arg11: memref<4x1xf32, #tpu.memory_space<vmem>>, %arg12: memref<4x1xf32, #tpu.memory_space<vmem>>, %arg13: memref<1x1xf32, #tpu.memory_space<vmem>>, %arg14: memref<1x2xf32, #tpu.memory_space<vmem>>) attributes {dimension_semantics = [], scalar_prefetch = 0 : i64, scratch_operands = 0 : i64, tpu.core_type = #tpu.core_type<tc>} {
    %c0 = arith.constant 0 : index
    %c0_0 = arith.constant 0 : index
    %0 = vector.load %arg1[%c0, %c0_0] : memref<16x32xbf16, #tpu.memory_space<vmem>>, vector<16x32xbf16>
    %c0_1 = arith.constant 0 : index
    %c0_2 = arith.constant 0 : index
    %1 = vector.load %arg0[%c0_1, %c0_2] : memref<32x128xbf16, #tpu.memory_space<vmem>>, vector<32x128xbf16>
    %cst = arith.constant dense<0.000000e+00> : vector<16x128xf32>
    %2 = tpu.matmul %0, %1, %cst {dimension_numbers = #tpu.dot_dimension_numbers<[1], [0], [0], [1], [0, 0, 1, 1], [], []>} : vector<16x32xbf16>, vector<32x128xbf16>, vector<16x128xf32> -> vector<16x128xf32>
    %c0_3 = arith.constant 0 : index
    %c0_4 = arith.constant 0 : index
    %3 = vector.load %arg2[%c0_3, %c0_4] : memref<16x1xf32, #tpu.memory_space<vmem>>, vector<16x1xf32>
    %4 = vector.broadcast %3 : vector<16x1xf32> to vector<16x128xf32>
    %5 = arith.addf %2, %4 : vector<16x128xf32>
    %cst_5 = arith.constant dense<0.000000e+00> : vector<16xf32>
    %6 = vector.multi_reduction <add>, %5, %cst_5 [1] : vector<16x128xf32> to vector<16xf32>
    %7 = vector.shape_cast %6 : vector<16xf32> to vector<16x1xf32>
    %cst_6 = arith.constant 7.812500e-03 : f32
    %8 = vector.broadcast %cst_6 : f32 to vector<16x1xf32>
    %9 = arith.mulf %7, %8 : vector<16x1xf32>
    %10 = vector.broadcast %9 : vector<16x1xf32> to vector<16x128xf32>
    %11 = arith.subf %5, %10 : vector<16x128xf32>
    %12 = arith.mulf %11, %11 : vector<16x128xf32>
    %cst_7 = arith.constant dense<0.000000e+00> : vector<16xf32>
    %13 = vector.multi_reduction <add>, %12, %cst_7 [1] : vector<16x128xf32> to vector<16xf32>
    %14 = vector.shape_cast %13 : vector<16xf32> to vector<16x1xf32>
    %cst_8 = arith.constant 7.812500e-03 : f32
    %15 = vector.broadcast %cst_8 : f32 to vector<16x1xf32>
    %16 = arith.mulf %14, %15 : vector<16x1xf32>
    %c0_9 = arith.constant 0 : index
    %c0_10 = arith.constant 0 : index
    %17 = vector.load %arg3[%c0_9, %c0_10] : memref<16x1xf32, #tpu.memory_space<vmem>>, vector<16x1xf32>
    %cst_11 = arith.constant 9.99999974E-6 : f32
    %18 = vector.broadcast %cst_11 : f32 to vector<16x1xf32>
    %19 = arith.addf %16, %18 : vector<16x1xf32>
    %20 = math.rsqrt %19 : vector<16x1xf32>
    %21 = arith.mulf %17, %20 : vector<16x1xf32>
    %22 = vector.broadcast %21 : vector<16x1xf32> to vector<16x128xf32>
    %23 = arith.mulf %11, %22 : vector<16x128xf32>
    %c0_12 = arith.constant 0 : index
    %c0_13 = arith.constant 0 : index
    %24 = vector.load %arg4[%c0_12, %c0_13] : memref<16x1xf32, #tpu.memory_space<vmem>>, vector<16x1xf32>
    %25 = vector.broadcast %24 : vector<16x1xf32> to vector<16x128xf32>
    %26 = arith.addf %23, %25 : vector<16x128xf32>
    %cst_14 = arith.constant 0.000000e+00 : f32
    %27 = vector.broadcast %cst_14 : f32 to vector<16x128xf32>
    %28 = arith.cmpf ogt, %26, %27 : vector<16x128xf32>
    %cst_15 = arith.constant 2.000000e-01 : f32
    %29 = vector.broadcast %cst_15 : f32 to vector<16x128xf32>
    %30 = arith.mulf %29, %26 : vector<16x128xf32>
    %31 = arith.select %28, %26, %30 : vector<16x128xi1>, vector<16x128xf32>
    %c0_16 = arith.constant 0 : index
    %c0_17 = arith.constant 0 : index
    %32 = vector.load %arg5[%c0_16, %c0_17] : memref<8x16xbf16, #tpu.memory_space<vmem>>, vector<8x16xbf16>
    %33 = arith.truncf %31 : vector<16x128xf32> to vector<16x128xbf16>
    %cst_18 = arith.constant dense<0.000000e+00> : vector<8x128xf32>
    %34 = tpu.matmul %32, %33, %cst_18 {dimension_numbers = #tpu.dot_dimension_numbers<[1], [0], [0], [1], [0, 0, 1, 1], [], []>} : vector<8x16xbf16>, vector<16x128xbf16>, vector<8x128xf32> -> vector<8x128xf32>
    %c0_19 = arith.constant 0 : index
    %c0_20 = arith.constant 0 : index
    %35 = vector.load %arg6[%c0_19, %c0_20] : memref<8x1xf32, #tpu.memory_space<vmem>>, vector<8x1xf32>
    %36 = vector.broadcast %35 : vector<8x1xf32> to vector<8x128xf32>
    %37 = arith.addf %34, %36 : vector<8x128xf32>
    %cst_21 = arith.constant dense<0.000000e+00> : vector<8xf32>
    %38 = vector.multi_reduction <add>, %37, %cst_21 [1] : vector<8x128xf32> to vector<8xf32>
    %39 = vector.shape_cast %38 : vector<8xf32> to vector<8x1xf32>
    %cst_22 = arith.constant 7.812500e-03 : f32
    %40 = vector.broadcast %cst_22 : f32 to vector<8x1xf32>
    %41 = arith.mulf %39, %40 : vector<8x1xf32>
    %42 = vector.broadcast %41 : vector<8x1xf32> to vector<8x128xf32>
    %43 = arith.subf %37, %42 : vector<8x128xf32>
    %44 = arith.mulf %43, %43 : vector<8x128xf32>
    %cst_23 = arith.constant dense<0.000000e+00> : vector<8xf32>
    %45 = vector.multi_reduction <add>, %44, %cst_23 [1] : vector<8x128xf32> to vector<8xf32>
    %46 = vector.shape_cast %45 : vector<8xf32> to vector<8x1xf32>
    %cst_24 = arith.constant 7.812500e-03 : f32
    %47 = vector.broadcast %cst_24 : f32 to vector<8x1xf32>
    %48 = arith.mulf %46, %47 : vector<8x1xf32>
    %c0_25 = arith.constant 0 : index
    %c0_26 = arith.constant 0 : index
    %49 = vector.load %arg7[%c0_25, %c0_26] : memref<8x1xf32, #tpu.memory_space<vmem>>, vector<8x1xf32>
    %cst_27 = arith.constant 9.99999974E-6 : f32
    %50 = vector.broadcast %cst_27 : f32 to vector<8x1xf32>
    %51 = arith.addf %48, %50 : vector<8x1xf32>
    %52 = math.rsqrt %51 : vector<8x1xf32>
    %53 = arith.mulf %49, %52 : vector<8x1xf32>
    %54 = vector.broadcast %53 : vector<8x1xf32> to vector<8x128xf32>
    %55 = arith.mulf %43, %54 : vector<8x128xf32>
    %c0_28 = arith.constant 0 : index
    %c0_29 = arith.constant 0 : index
    %56 = vector.load %arg8[%c0_28, %c0_29] : memref<8x1xf32, #tpu.memory_space<vmem>>, vector<8x1xf32>
    %57 = vector.broadcast %56 : vector<8x1xf32> to vector<8x128xf32>
    %58 = arith.addf %55, %57 : vector<8x128xf32>
    %cst_30 = arith.constant 0.000000e+00 : f32
    %59 = vector.broadcast %cst_30 : f32 to vector<8x128xf32>
    %60 = arith.cmpf ogt, %58, %59 : vector<8x128xf32>
    %cst_31 = arith.constant 2.000000e-01 : f32
    %61 = vector.broadcast %cst_31 : f32 to vector<8x128xf32>
    %62 = arith.mulf %61, %58 : vector<8x128xf32>
    %63 = arith.select %60, %58, %62 : vector<8x128xi1>, vector<8x128xf32>
    %c0_32 = arith.constant 0 : index
    %c0_33 = arith.constant 0 : index
    %64 = vector.load %arg9[%c0_32, %c0_33] : memref<128x2xf32, #tpu.memory_space<vmem>>, vector<128x2xf32>
    %cst_34 = arith.constant dense<0.000000e+00> : vector<8x2xf32>
    %65 = tpu.matmul %63, %64, %cst_34 {dimension_numbers = #tpu.dot_dimension_numbers<[1], [0], [0], [1], [0, 0, 1, 1], [], []>} : vector<8x128xf32>, vector<128x2xf32>, vector<8x2xf32> -> vector<8x2xf32>
    %c0_35 = arith.constant 0 : index
    %c0_36 = arith.constant 0 : index
    %66 = vector.load %arg10[%c0_35, %c0_36] : memref<4x8xf32, #tpu.memory_space<vmem>>, vector<4x8xf32>
    %cst_37 = arith.constant dense<0.000000e+00> : vector<4x2xf32>
    %67 = tpu.matmul %66, %65, %cst_37 {dimension_numbers = #tpu.dot_dimension_numbers<[1], [0], [0], [1], [0, 0, 1, 1], [], []>} : vector<4x8xf32>, vector<8x2xf32>, vector<4x2xf32> -> vector<4x2xf32>
    %c0_38 = arith.constant 0 : index
    %c0_39 = arith.constant 0 : index
    %68 = vector.load %arg11[%c0_38, %c0_39] : memref<4x1xf32, #tpu.memory_space<vmem>>, vector<4x1xf32>
    %69 = vector.broadcast %68 : vector<4x1xf32> to vector<4x2xf32>
    %70 = arith.addf %67, %69 : vector<4x2xf32>
    %cst_40 = arith.constant 0.000000e+00 : f32
    %71 = vector.broadcast %cst_40 : f32 to vector<4x2xf32>
    %72 = arith.cmpf ogt, %70, %71 : vector<4x2xf32>
    %cst_41 = arith.constant 2.000000e-01 : f32
    %73 = vector.broadcast %cst_41 : f32 to vector<4x2xf32>
    %74 = arith.mulf %73, %70 : vector<4x2xf32>
    %75 = arith.select %72, %70, %74 : vector<4x2xi1>, vector<4x2xf32>
    %c0_42 = arith.constant 0 : index
    %c0_43 = arith.constant 0 : index
    %76 = vector.load %arg12[%c0_42, %c0_43] : memref<4x1xf32, #tpu.memory_space<vmem>>, vector<4x1xf32>
    %77 = vector.broadcast %76 : vector<4x1xf32> to vector<4x2xf32>
    %78 = arith.mulf %75, %77 : vector<4x2xf32>
    %cst_44 = arith.constant dense<0.000000e+00> : vector<2xf32>
    %79 = vector.multi_reduction <add>, %78, %cst_44 [0] : vector<4x2xf32> to vector<2xf32>
    %80 = vector.shape_cast %79 : vector<2xf32> to vector<1x2xf32>
    %c0_45 = arith.constant 0 : index
    %c0_46 = arith.constant 0 : index
    %81 = vector.load %arg13[%c0_45, %c0_46] : memref<1x1xf32, #tpu.memory_space<vmem>>, vector<1x1xf32>
    %82 = vector.broadcast %81 : vector<1x1xf32> to vector<1x2xf32>
    %83 = arith.addf %80, %82 : vector<1x2xf32>
    %cst_47 = arith.constant 0.000000e+00 : f32
    %84 = vector.broadcast %cst_47 : f32 to vector<1x2xf32>
    %85 = arith.subf %84, %83 : vector<1x2xf32>
    %86 = math.exp %85 : vector<1x2xf32>
    %cst_48 = arith.constant 1.000000e+00 : f32
    %87 = vector.broadcast %cst_48 : f32 to vector<1x2xf32>
    %88 = arith.addf %87, %86 : vector<1x2xf32>
    %cst_49 = arith.constant 1.000000e+00 : f32
    %89 = vector.broadcast %cst_49 : f32 to vector<1x2xf32>
    %90 = arith.divf %89, %88 : vector<1x2xf32>
    %c0_50 = arith.constant 0 : index
    %c0_51 = arith.constant 0 : index
    %91 = vector.load %arg14[%c0_50, %c0_51] : memref<1x2xf32, #tpu.memory_space<vmem>>, vector<1x2xf32>
    tpu.vector_store %arg14[%c0_50, %c0_51], %90 {strides = array<i32>} : memref<1x2xf32, #tpu.memory_space<vmem>>, vector<1x2xf32>,
    return
  }
}

</mosaic_0001>

<llo_original>
// kernel: tpu_custom_call.1
$region0: #{tpu_custom_call.1}
  #allocation0 [shape = 'u32[]', space=smem, size = 0x4, offset = 0x4, fixed_abs, tag = 'smem constant byte address 0x4 - core index']
  #allocation1 [shape = 'u32[144,128]{1,0:T(1,128)}', space=vmem, size = 0x12000, scoped, tag = 'internal scratch']
  #allocation2 [shape = 'f32[1,1]{1,0:T(1,128)S(1)}', space=vmem, size = 0x200, scoped, tag = 'scoped memory for tpu_custom_call.1']
  %s0 = inlined_call_operand.vmem [shape: bf16[32,128], index: 0, kind: input, shape index: {}]
  %s1 = inlined_call_operand.vmem [shape: bf16[16,32], index: 1, kind: input, shape index: {}]
  %s2 = inlined_call_operand.vmem [shape: f32[16,1], index: 2, kind: input, shape index: {}]
  %s3 = inlined_call_operand.vmem [shape: f32[16,1], index: 3, kind: input, shape index: {}]
  %s4 = inlined_call_operand.vmem [shape: f32[16,1], index: 4, kind: input, shape index: {}]
  %s5 = inlined_call_operand.vmem [shape: bf16[8,16], index: 5, kind: input, shape index: {}]
  %s6 = inlined_call_operand.vmem [shape: f32[8,1], index: 6, kind: input, shape index: {}]
  %s7 = inlined_call_operand.vmem [shape: f32[8,1], index: 7, kind: input, shape index: {}]
  %s8 = inlined_call_operand.vmem [shape: f32[8,1], index: 8, kind: input, shape index: {}]
  %s9 = inlined_call_operand.vmem [shape: f32[128,2], index: 9, kind: input, shape index: {}]
  %s10 = inlined_call_operand.vmem [shape: f32[4,8], index: 10, kind: input, shape index: {}]
  %s11 = inlined_call_operand.vmem [shape: f32[4,1], index: 11, kind: input, shape index: {}]
  %s12 = inlined_call_operand.vmem [shape: f32[4,1], index: 12, kind: input, shape index: {}]
  %s13 = inlined_call_operand.<no memory space> [shape: f32[1,1], index: 13, kind: input, shape index: {}]
  %s14 = inlined_call_operand.hbm [shape: f32[1,2], index: 14, kind: output, shape index: {}]
  %s15 = sld [smem:[#allocation0]]
  $region66: #{tpu_custom_call.1} parent=0
    _
  %s17 = ssub.s32 1, %s15
  %s18 = scalar_select 0, %s17, %s15
  %v19 = vstv %s13
  %20 = vst [vmem:[#allocation2] sm:$0x1] %v19
  $region1: #{tpu_custom_call.1} parent=0
    #allocation3 [shape = 'u8[512]{0}', space=vmem, size = 0x400, scoped, tag = 'output window, operand 0, single buffered']
    #allocation4 [shape = 's32[1]{0}', space=sflag, size = 0x4, scoped, tag = 'scoped memory for tpu_custom_call.1']
    %21 = vsyncpa [#allocation4], 0
    // Predicated region
    $region2: #{tpu_custom_call.1} parent=1 // pred_check
      _
    $region3: #{tpu_custom_call.1} parent=1 // pred_check_branch
      %23 = sbr.rel (0) target = $region5
    $region4: #{tpu_custom_call.1} parent=1 // pred_region
      _
    $region5: #{tpu_custom_call.1} parent=1 // pred_fallthru
      _
    // Predicated region
    $region6: #{tpu_custom_call.1} parent=1 // pred_check
      _
    $region7: #{tpu_custom_call.1} parent=1 // pred_check_branch
      %25 = sbr.rel (0) target = $region9
    $region8: #{tpu_custom_call.1} parent=1 // pred_region
      _
    $region9: #{tpu_custom_call.1} parent=1 // pred_fallthru
      _
    // Predicated region
    $region10: #{tpu_custom_call.1} parent=1 // pred_check
      _
    $region11: #{tpu_custom_call.1} parent=1 // pred_check_branch
      %27 = sbr.rel (0) target = $region13
    $region12: #{tpu_custom_call.1} parent=1 // pred_region
      _
    $region13: #{tpu_custom_call.1} parent=1 // pred_fallthru
      _
    // Predicated region
    $region14: #{tpu_custom_call.1} parent=1 // pred_check
      _
    $region15: #{tpu_custom_call.1} parent=1 // pred_check_branch
      %29 = sbr.rel (0) target = $region17
    $region16: #{tpu_custom_call.1} parent=1 // pred_region
      _
    $region17: #{tpu_custom_call.1} parent=1 // pred_fallthru
      _
    // Predicated region
    $region18: #{tpu_custom_call.1} parent=1 // pred_check
      _
    $region19: #{tpu_custom_call.1} parent=1 // pred_check_branch
      %31 = sbr.rel (0) target = $region21
    $region20: #{tpu_custom_call.1} parent=1 // pred_region
      _
    $region21: #{tpu_custom_call.1} parent=1 // pred_fallthru
      _
    // Predicated region
    $region22: #{tpu_custom_call.1} parent=1 // pred_check
      _
    $region23: #{tpu_custom_call.1} parent=1 // pred_check_branch
      %33 = sbr.rel (0) target = $region25
    $region24: #{tpu_custom_call.1} parent=1 // pred_region
      _
    $region25: #{tpu_custom_call.1} parent=1 // pred_fallthru
      _
    // Predicated region
    $region26: #{tpu_custom_call.1} parent=1 // pred_check
      _
    $region27: #{tpu_custom_call.1} parent=1 // pred_check_branch
      %35 = sbr.rel (0) target = $region29
    $region28: #{tpu_custom_call.1} parent=1 // pred_region
      _
    $region29: #{tpu_custom_call.1} parent=1 // pred_fallthru
      _
    // Predicated region
    $region30: #{tpu_custom_call.1} parent=1 // pred_check
      _
    $region31: #{tpu_custom_call.1} parent=1 // pred_check_branch
      %37 = sbr.rel (0) target = $region33
    $region32: #{tpu_custom_call.1} parent=1 // pred_region
      _
    $region33: #{tpu_custom_call.1} parent=1 // pred_fallthru
      _
    // Predicated region
    $region34: #{tpu_custom_call.1} parent=1 // pred_check
      _
    $region35: #{tpu_custom_call.1} parent=1 // pred_check_branch
      %39 = sbr.rel (0) target = $region37
    $region36: #{tpu_custom_call.1} parent=1 // pred_region
      _
    $region37: #{tpu_custom_call.1} parent=1 // pred_fallthru
      _
    // Predicated region
    $region38: #{tpu_custom_call.1} parent=1 // pred_check
      _
    $region39: #{tpu_custom_call.1} parent=1 // pred_check_branch
      %41 = sbr.rel (0) target = $region41
    $region40: #{tpu_custom_call.1} parent=1 // pred_region
      _
    $region41: #{tpu_custom_call.1} parent=1 // pred_fallthru
      _
    // Predicated region
    $region42: #{tpu_custom_call.1} parent=1 // pred_check
      _
    $region43: #{tpu_custom_call.1} parent=1 // pred_check_branch
      %43 = sbr.rel (0) target = $region45
    $region44: #{tpu_custom_call.1} parent=1 // pred_region
      _
    $region45: #{tpu_custom_call.1} parent=1 // pred_fallthru
      _
    // Predicated region
    $region46: #{tpu_custom_call.1} parent=1 // pred_check
      _
    $region47: #{tpu_custom_call.1} parent=1 // pred_check_branch
      %45 = sbr.rel (0) target = $region49
    $region48: #{tpu_custom_call.1} parent=1 // pred_region
      _
    $region49: #{tpu_custom_call.1} parent=1 // pred_fallthru
      _
    // Predicated region
    $region50: #{tpu_custom_call.1} parent=1 // pred_check
      _
    $region51: #{tpu_custom_call.1} parent=1 // pred_check_branch
      %47 = sbr.rel (0) target = $region53
    $region52: #{tpu_custom_call.1} parent=1 // pred_region
      _
    $region53: #{tpu_custom_call.1} parent=1 // pred_fallthru
      _
    // Predicated region
    $region54: #{tpu_custom_call.1} parent=1 // pred_check
      _
    $region55: #{tpu_custom_call.1} parent=1 // pred_check_branch
      %49 = sbr.rel (0) target = $region57
    $region56: #{tpu_custom_call.1} parent=1 // pred_region
      _
    $region57: #{tpu_custom_call.1} parent=1 // pred_fallthru
      _
    %v51 = vld [vmem:[%s1] sm:$0xf]
    %v52 = vld [vmem:[%s1 + $0x4] sm:$0xf]
    %v53 = vld [vmem:[%s0] sm:$0xf]
    %v54 = vld [vmem:[%s0 + $0x4] sm:$0xf]
    %v55 = vld [vmem:[%s0 + $0x8] sm:$0xf]
    %v56 = vld [vmem:[%s0 + $0xc] sm:$0xf]
    %v57 = vld [vmem:[%s2] sm:$0xff]
    %v58 = vld [vmem:[%s2 + $0x8] sm:$0xff]
    %60 = vset.pattern.permute.xlu0 0
    %61 = vperm.xlu0 %60, %v57
    %v62 = vpop.permute.xlu0 %61
    %65 = vset.pattern.permute.xlu0 0
    %66 = vperm.xlu0 %65, %v58
    %v67 = vpop.permute.xlu0 %66
    %v71 = vunpack.c.l.b16 %v51
    %v72 = vunpack.c.l.b16 %v52
    %v73 = vpack.c.b16 %v72, %v71
    %v78 = vunpack.c.l.b16 %v53
    %v79 = vunpack.c.l.b16 %v54
    %v80 = vunpack.c.l.b16 %v55
    %v81 = vunpack.c.l.b16 %v56
    %v82 = vpack.c.b16 %v79, %v78
    %v83 = vpack.c.b16 %v81, %v80
    %vm86 = vcmask 261120
    %v88 = vsel %vm86, %v73, 0
    %90 = vmatprep.subr.bf16.mxu0 0
    %91 = vmatpush1.bf16.msra.mxu0 0
    %92 = vmatprep.subr.bf16.mxu0 0
    %93 = vmatpush1.bf16.msra.mxu0 0
    %94 = vmatprep.subr.bf16.mxu0 0
    %95 = vmatpush1.bf16.msra.mxu0 0
    %96 = vmatprep.subr.bf16.mxu0 0
    %97 = vmatpush1.bf16.msra.mxu0 0
    %98 = vmatprep.subr.bf16.mxu0 0
    %99 = vmatpush1.bf16.msra.mxu0 0
    %100 = vmatprep.subr.bf16.mxu0 0
    %101 = vmatpush1.bf16.msra.mxu0 0
    %102 = vmatprep.subr.bf16.mxu0 0
    %103 = vmatpush1.bf16.msra.mxu0 %v83
    %104 = vmatprep.subr.bf16.mxu0 0
    %105 = vmatpush1.bf16.msra.mxu0 %v82
    %106 = vmatprep.subr.bf16.mxu0 0
    %107 = vmatpush2.bf16.msra.mxu0 0
    %108 = vmatprep.subr.bf16.mxu0 0
    %109 = vmatpush2.bf16.msra.mxu0 0
    %110 = vmatprep.subr.bf16.mxu0 0
    %111 = vmatpush2.bf16.msra.mxu0 0
    %112 = vmatprep.subr.bf16.mxu0 0
    %113 = vmatpush2.bf16.msra.mxu0 0
    %114 = vmatprep.subr.bf16.mxu0 0
    %115 = vmatpush2.bf16.msra.mxu0 0
    %116 = vmatprep.subr.bf16.mxu0 0
    %117 = vmatpush2.bf16.msra.mxu0 0
    %118 = vmatprep.subr.bf16.mxu0 0
    %119 = vmatpush2.bf16.msra.mxu0 0
    %120 = vmatprep.subr.bf16.mxu0 0
    %121 = vmatpush2.bf16.msra.mxu0 0
    %122 = vmatprep.mubr.bf16.mxu0 0
    %123 = vmatmul.mubr.bf16.gmra.mxu0 %v88
    %v124 = vpop.f32.mrf.mxu0
    %v125 = vadd.f32 %v62, %v124
    %v126 = vpop.f32.mrf.mxu0
    %v127 = vpop.f32.mrf.mxu0
    %v128 = vadd.f32 %v67, %v127
    %v129 = vpop.f32.mrf.mxu0
    %130 = vdwg.mxu0
    %131 = vadd.xlane.f32.xlu0 %v125
    %v132 = vpop.xlane.xlu0 %131
    %133 = vadd.xlane.f32.xlu0 %v128
    %v134 = vpop.xlane.xlu0 %133
    %v135 = vmul.f32 %v132, 0.0078125
    %v136 = vmul.f32 %v134, 0.0078125
    %v137 = vsub.f32 %v125, %v135
    %v138 = vsub.f32 %v128, %v136
    %v139 = vmul.f32 %v137, %v137
    %v140 = vmul.f32 %v138, %v138
    %141 = vadd.xlane.f32.xlu0 %v139
    %v142 = vpop.xlane.xlu0 %141
    %143 = vadd.xlane.f32.xlu0 %v140
    %v144 = vpop.xlane.xlu0 %143
    %v145 = vmul.f32 %v142, 0.0078125
    %v146 = vmul.f32 %v144, 0.0078125
    %v147 = vld [vmem:[%s3] sm:$0xff]
    %v148 = vld [vmem:[%s3 + $0x8] sm:$0xff]
    %v149 = vadd.f32 %v145, 1e-05
    %v150 = vadd.f32 %v146, 1e-05
    %v151 = vrsqrt.pop %v149
    %v152 = vrsqrt.pop %v150
    %v153 = vmul.f32 %v147, %v151
    %v154 = vmul.f32 %v148, %v152
    %156 = vset.pattern.permute.xlu0 0
    %157 = vperm.xlu0 %156, %v153
    %v158 = vpop.permute.xlu0 %157
    %161 = vset.pattern.permute.xlu0 0
    %162 = vperm.xlu0 %161, %v154
    %v163 = vpop.permute.xlu0 %162
    %v165 = vmul.f32 %v137, %v158
    %v166 = vmul.f32 %v138, %v163
    %v167 = vld [vmem:[%s4] sm:$0xff]
    %v168 = vld [vmem:[%s4 + $0x8] sm:$0xff]
    %170 = vset.pattern.permute.xlu0 0
    %171 = vperm.xlu0 %170, %v167
    %v172 = vpop.permute.xlu0 %171
    %175 = vset.pattern.permute.xlu0 0
    %176 = vperm.xlu0 %175, %v168
    %v177 = vpop.permute.xlu0 %176
    %v179 = vadd.f32 %v165, %v172
    %v180 = vadd.f32 %v166, %v177
    %vm181 = vcmp.gt.f32.partialorder %v179, 0.0
    %vm182 = vcmp.gt.f32.partialorder %v180, 0.0
    %v183 = vmul.f32 %v179, 0.2
    %v184 = vmul.f32 %v180, 0.2
    %v185 = vsel %vm181, %v179, %v183
    %v186 = vsel %vm182, %v180, %v184
    %v187 = vld [vmem:[%s5] sm:$0xf]
    %v188 = vpack.c.bf16 %v186, %v185
    %v189 = vld [vmem:[%s6] sm:$0xff]
    %191 = vset.pattern.permute.xlu0 0
    %192 = vperm.xlu0 %191, %v189
    %v193 = vpop.permute.xlu0 %192
    %vm195 = vcmask 130048
    %v197 = vsel %vm195, %v187, 0
    %199 = vmatprep.subr.bf16.mxu0 0
    %200 = vmatpush1.bf16.msra.mxu0 0
    %201 = vmatprep.subr.bf16.mxu0 0
    %202 = vmatpush1.bf16.msra.mxu0 0
    %203 = vmatprep.subr.bf16.mxu0 0
    %204 = vmatpush1.bf16.msra.mxu0 0
    %205 = vmatprep.subr.bf16.mxu0 0
    %206 = vmatpush1.bf16.msra.mxu0 0
    %207 = vmatprep.subr.bf16.mxu0 0
    %208 = vmatpush1.bf16.msra.mxu0 0
    %209 = vmatprep.subr.bf16.mxu0 0
    %210 = vmatpush1.bf16.msra.mxu0 0
    %211 = vmatprep.subr.bf16.mxu0 0
    %212 = vmatpush1.bf16.msra.mxu0 0
    %213 = vmatprep.subr.bf16.mxu0 0
    %214 = vmatpush1.bf16.msra.mxu0 %v188
    %215 = vmatprep.subr.bf16.mxu0 0
    %216 = vmatpush2.bf16.msra.mxu0 0
    %217 = vmatprep.subr.bf16.mxu0 0
    %218 = vmatpush2.bf16.msra.mxu0 0
    %219 = vmatprep.subr.bf16.mxu0 0
    %220 = vmatpush2.bf16.msra.mxu0 0
    %221 = vmatprep.subr.bf16.mxu0 0
    %222 = vmatpush2.bf16.msra.mxu0 0
    %223 = vmatprep.subr.bf16.mxu0 0
    %224 = vmatpush2.bf16.msra.mxu0 0
    %225 = vmatprep.subr.bf16.mxu0 0
    %226 = vmatpush2.bf16.msra.mxu0 0
    %227 = vmatprep.subr.bf16.mxu0 0
    %228 = vmatpush2.bf16.msra.mxu0 0
    %229 = vmatprep.subr.bf16.mxu0 0
    %230 = vmatpush2.bf16.msra.mxu0 0
    %231 = vmatprep.mubr.bf16.mxu0 0
    %232 = vmatmul.mubr.bf16.gmra.mxu0 %v197
    %v233 = vpop.f32.mrf.mxu0
    %v234 = vadd.f32 %v193, %v233
    %v235 = vpop.f32.mrf.mxu0
    %v236 = vpop.f32.mrf.mxu0
    %v237 = vpop.f32.mrf.mxu0
    %238 = vdwg.mxu0
    %239 = vadd.xlane.f32.xlu0 %v234
    %v240 = vpop.xlane.xlu0 %239
    %v241 = vmul.f32 %v240, 0.0078125
    %v242 = vsub.f32 %v234, %v241
    %v243 = vmul.f32 %v242, %v242
    %244 = vadd.xlane.f32.xlu0 %v243
    %v245 = vpop.xlane.xlu0 %244
    %v246 = vmul.f32 %v245, 0.0078125
    %v247 = vld [vmem:[%s7] sm:$0xff]
    %v248 = vadd.f32 %v246, 1e-05
    %v249 = vrsqrt.pop %v248
    %v250 = vmul.f32 %v247, %v249
    %252 = vset.pattern.permute.xlu0 0
    %253 = vperm.xlu0 %252, %v250
    %v254 = vpop.permute.xlu0 %253
    %v256 = vmul.f32 %v242, %v254
    %v257 = vld [vmem:[%s8] sm:$0xff]
    %259 = vset.pattern.permute.xlu0 0
    %260 = vperm.xlu0 %259, %v257
    %v261 = vpop.permute.xlu0 %260
    %v263 = vadd.f32 %v256, %v261
    %vm264 = vcmp.gt.f32.partialorder %v263, 0.0
    %v265 = vmul.f32 %v263, 0.2
    %v266 = vsel %vm264, %v263, %v265
    %v267 = vld [vmem:[%s9] sm:$0xff]
    %v268 = vld [vmem:[%s9 + $0x8] sm:$0xff]
    %v269 = vld [vmem:[%s9 + $0x10] sm:$0xff]
    %v270 = vld [vmem:[%s9 + $0x18] sm:$0xff]
    %v271 = vld [vmem:[%s9 + $0x20] sm:$0xff]
    %v272 = vld [vmem:[%s9 + $0x28] sm:$0xff]
    %v273 = vld [vmem:[%s9 + $0x30] sm:$0xff]
    %v274 = vld [vmem:[%s9 + $0x38] sm:$0xff]
    %v275 = vld [vmem:[%s9 + $0x40] sm:$0xff]
    %v276 = vld [vmem:[%s9 + $0x48] sm:$0xff]
    %v277 = vld [vmem:[%s9 + $0x50] sm:$0xff]
    %v278 = vld [vmem:[%s9 + $0x58] sm:$0xff]
    %v279 = vld [vmem:[%s9 + $0x60] sm:$0xff]
    %v280 = vld [vmem:[%s9 + $0x68] sm:$0xff]
    %v281 = vld [vmem:[%s9 + $0x70] sm:$0xff]
    %v282 = vld [vmem:[%s9 + $0x78] sm:$0xff]
    %283 = vmatprep.subr.mxu0 0.0
    %284 = vmatpush1.msra.mxu0 %v282
    %285 = vmatprep.subr.mxu0 0.0
    %286 = vmatpush1.msra.mxu0 %v281
    %287 = vmatprep.subr.mxu0 0.0
    %288 = vmatpush1.msra.mxu0 %v280
    %289 = vmatprep.subr.mxu0 0.0
    %290 = vmatpush1.msra.mxu0 %v279
    %291 = vmatprep.subr.mxu0 0.0
    %292 = vmatpush1.msra.mxu0 %v278
    %293 = vmatprep.subr.mxu0 0.0
    %294 = vmatpush1.msra.mxu0 %v277
    %295 = vmatprep.subr.mxu0 0.0
    %296 = vmatpush1.msra.mxu0 %v276
    %297 = vmatprep.subr.mxu0 0.0
    %298 = vmatpush1.msra.mxu0 %v275
    %299 = vmatprep.subr.mxu0 0.0
    %300 = vmatpush1.msra.mxu0 %v274
    %301 = vmatprep.subr.mxu0 0.0
    %302 = vmatpush1.msra.mxu0 %v273
    %303 = vmatprep.subr.mxu0 0.0
    %304 = vmatpush1.msra.mxu0 %v272
    %305 = vmatprep.subr.mxu0 0.0
    %306 = vmatpush1.msra.mxu0 %v271
    %307 = vmatprep.subr.mxu0 0.0
    %308 = vmatpush1.msra.mxu0 %v270
    %309 = vmatprep.subr.mxu0 0.0
    %310 = vmatpush1.msra.mxu0 %v269
    %311 = vmatprep.subr.mxu0 0.0
    %312 = vmatpush1.msra.mxu0 %v268
    %313 = vmatprep.subr.mxu0 0.0
    %314 = vmatpush1.msra.mxu0 %v267
    %315 = vmatprep.subr.mxu0 0.0
    %316 = vmatpush2.msra.mxu0 0.0
    %317 = vmatprep.subr.mxu0 0.0
    %318 = vmatpush2.msra.mxu0 0.0
    %319 = vmatprep.subr.mxu0 0.0
    %320 = vmatpush2.msra.mxu0 0.0
    %321 = vmatprep.subr.mxu0 0.0
    %322 = vmatpush2.msra.mxu0 0.0
    %323 = vmatprep.subr.mxu0 0.0
    %324 = vmatpush2.msra.mxu0 0.0
    %325 = vmatprep.subr.mxu0 0.0
    %326 = vmatpush2.msra.mxu0 0.0
    %327 = vmatprep.subr.mxu0 0.0
    %328 = vmatpush2.msra.mxu0 0.0
    %329 = vmatprep.subr.mxu0 0.0
    %330 = vmatpush2.msra.mxu0 0.0
    %331 = vmatprep.subr.mxu0 0.0
    %332 = vmatpush2.msra.mxu0 0.0
    %333 = vmatprep.subr.mxu0 0.0
    %334 = vmatpush2.msra.mxu0 0.0
    %335 = vmatprep.subr.mxu0 0.0
    %336 = vmatpush2.msra.mxu0 0.0
    %337 = vmatprep.subr.mxu0 0.0
    %338 = vmatpush2.msra.mxu0 0.0
    %339 = vmatprep.subr.mxu0 0.0
    %340 = vmatpush2.msra.mxu0 0.0
    %341 = vmatprep.subr.mxu0 0.0
    %342 = vmatpush2.msra.mxu0 0.0
    %343 = vmatprep.subr.mxu0 0.0
    %344 = vmatpush2.msra.mxu0 0.0
    %345 = vmatprep.subr.mxu0 0.0
    %346 = vmatpush2.msra.mxu0 0.0
    %347 = vmatprep.mubr.f32.mxu0 0.0
    %348 = vmatmul.mubr.f32.gmra.mxu0 %v266
    %v349 = vpop.f32.mrf.mxu0
    %v350 = vadd.f32 0.0, %v349
    %v351 = vpop.f32.mrf.mxu0
    %352 = vdwg.mxu0
    %v353 = vld [vmem:[%s10] sm:$0xf]
    %v354 = vld [vmem:[%s11] sm:$0xf]
    %356 = vset.pattern.permute.xlu0 0
    %357 = vperm.xlu0 %356, %v354
    %v358 = vpop.permute.xlu0 %357
    %vm360 = vcmask 64512
    %v362 = vsel %vm360, %v353, 0
    %364 = vmatprep.subr.mxu0 0.0
    %365 = vmatpush1.msra.mxu0 0.0
    %366 = vmatprep.subr.mxu0 0.0
    %367 = vmatpush1.msra.mxu0 0.0
    %368 = vmatprep.subr.mxu0 0.0
    %369 = vmatpush1.msra.mxu0 0.0
    %370 = vmatprep.subr.mxu0 0.0
    %371 = vmatpush1.msra.mxu0 0.0
    %372 = vmatprep.subr.mxu0 0.0
    %373 = vmatpush1.msra.mxu0 0.0
    %374 = vmatprep.subr.mxu0 0.0
    %375 = vmatpush1.msra.mxu0 0.0
    %376 = vmatprep.subr.mxu0 0.0
    %377 = vmatpush1.msra.mxu0 0.0
    %378 = vmatprep.subr.mxu0 0.0
    %379 = vmatpush1.msra.mxu0 0.0
    %380 = vmatprep.subr.mxu0 0.0
    %381 = vmatpush1.msra.mxu0 0.0
    %382 = vmatprep.subr.mxu0 0.0
    %383 = vmatpush1.msra.mxu0 0.0
    %384 = vmatprep.subr.mxu0 0.0
    %385 = vmatpush1.msra.mxu0 0.0
    %386 = vmatprep.subr.mxu0 0.0
    %387 = vmatpush1.msra.mxu0 0.0
    %388 = vmatprep.subr.mxu0 0.0
    %389 = vmatpush1.msra.mxu0 0.0
    %390 = vmatprep.subr.mxu0 0.0
    %391 = vmatpush1.msra.mxu0 0.0
    %392 = vmatprep.subr.mxu0 0.0
    %393 = vmatpush1.msra.mxu0 0.0
    %394 = vmatprep.subr.mxu0 0.0
    %395 = vmatpush1.msra.mxu0 %v350
    %396 = vmatprep.subr.mxu0 0.0
    %397 = vmatpush2.msra.mxu0 0.0
    %398 = vmatprep.subr.mxu0 0.0
    %399 = vmatpush2.msra.mxu0 0.0
    %400 = vmatprep.subr.mxu0 0.0
    %401 = vmatpush2.msra.mxu0 0.0
    %402 = vmatprep.subr.mxu0 0.0
    %403 = vmatpush2.msra.mxu0 0.0
    %404 = vmatprep.subr.mxu0 0.0
    %405 = vmatpush2.msra.mxu0 0.0
    %406 = vmatprep.subr.mxu0 0.0
    %407 = vmatpush2.msra.mxu0 0.0
    %408 = vmatprep.subr.mxu0 0.0
    %409 = vmatpush2.msra.mxu0 0.0
    %410 = vmatprep.subr.mxu0 0.0
    %411 = vmatpush2.msra.mxu0 0.0
    %412 = vmatprep.subr.mxu0 0.0
    %413 = vmatpush2.msra.mxu0 0.0
    %414 = vmatprep.subr.mxu0 0.0
    %415 = vmatpush2.msra.mxu0 0.0
    %416 = vmatprep.subr.mxu0 0.0
    %417 = vmatpush2.msra.mxu0 0.0
    %418 = vmatprep.subr.mxu0 0.0
    %419 = vmatpush2.msra.mxu0 0.0
    %420 = vmatprep.subr.mxu0 0.0
    %421 = vmatpush2.msra.mxu0 0.0
    %422 = vmatprep.subr.mxu0 0.0
    %423 = vmatpush2.msra.mxu0 0.0
    %424 = vmatprep.subr.mxu0 0.0
    %425 = vmatpush2.msra.mxu0 0.0
    %426 = vmatprep.subr.mxu0 0.0
    %427 = vmatpush2.msra.mxu0 0.0
    %428 = vmatprep.mubr.f32.mxu0 0.0
    %429 = vmatmul.mubr.f32.gmra.mxu0 %v362
    %v430 = vpop.f32.mrf.mxu0
    %v431 = vadd.f32 %v358, %v430
    %v432 = vpop.f32.mrf.mxu0
    %433 = vdwg.mxu0
    %vm434 = vcmp.gt.f32.partialorder %v431, 0.0
    %v435 = vmul.f32 %v431, 0.2
    %v436 = vsel %vm434, %v431, %v435
    %v437 = vld [vmem:[%s12] sm:$0xf]
    %439 = vset.pattern.permute.xlu0 0
    %440 = vperm.xlu0 %439, %v437
    %v441 = vpop.permute.xlu0 %440
    %v443 = vmul.f32 %v436, %v441
    %vm444 = vcmask 11264
    %v445 = vsel %vm444, %v443, 0.0
    %v446 = vrot.slane %v445, 4
    %v447 = vadd.f32 %v445, %v446
    %v448 = vrot.slane %v447, 2
    %v449 = vadd.f32 %v447, %v448
    %v450 = vrot.slane %v449, 1
    %v451 = vadd.f32 %v449, %v450
    %v452 = vld [vmem:[#allocation2] sm:$0x1]
    %454 = vset.pattern.permute.xlu0 0
    %455 = vperm.xlu0 %454, %v452
    %v456 = vpop.permute.xlu0 %455
    %v458 = vlaneseq
    %v459 = vshrl.u32 %v458, 7
    %v460 = vsub.s32 0, %v459
    %v461 = vrot.slane %v456, %v460
    %v462 = vadd.f32 %v451, %v461
    %v463 = vsub.f32 0.0, %v462
    %v464 = vmul.f32 %v463, 1.442695
    %v465 = vpow.pop %v464
    %v466 = vadd.f32 %v465, 1.0
    %v467 = vrcp.pop %v466
    %v468 = vmul.f32 1.0, %v467
    %vm469 = vcmask 8192
    %470 = vst.msk [vmem:[#allocation3] sm:$0x1] %vm469, %v468
    // Predicated region
    $region58: #{tpu_custom_call.1} parent=1 // pred_check
      _
    $region59: #{tpu_custom_call.1} parent=1 // pred_check_branch
      %472 = sbr.rel (0) target = $region61
    $region60: #{tpu_custom_call.1} parent=1 // pred_region
      %s474 = ssub.s32 16, 16
      %475 = vsyncadd [#allocation4], %s474
      %s477 = sshll.u32 [#allocation3], 4
      %s478 = int_to_ptr.vmem [resolvable:$true] %s477
      %480 = dma.vmem_to_hbm [thread:$0]  %s478, 16, %s14, [#allocation4]
    $region61: #{tpu_custom_call.1} parent=1 // pred_fallthru
      _
    // Predicated region
    $region62: #{tpu_custom_call.1} parent=1 // pred_check
      _
    $region63: #{tpu_custom_call.1} parent=1 // pred_check_branch
      %482 = sbr.rel (0) target = $region65
    $region64: #{tpu_custom_call.1} parent=1 // pred_region
      %483 = dma.done [#allocation4], 16
    $region65: #{tpu_custom_call.1} parent=1 // pred_fallthru
      _
    %484 = vsyncpa [#allocation4], 1

</llo_original>
